<compile_context>
chip_gen: v7x
topology: tpu7x:2x2x1
jax: 0.10.0
libtpu: 0.0.40
codegen_flags: <defaults>
</compile_context>

<pallas_src>
import jax
import jax.numpy as jnp
from jax.experimental import pallas as pl
from jax.experimental.pallas import tpu as pltpu


def _round_up(v, m):
    return ((v + m - 1) // m) * m


def channel_wise_conv(x, weight, stride=1):
    """Depthwise (groups=nIn) Conv2d with circular padding, no bias.

    x:      (N, nIn, H, W)   float32, NCHW (PyTorch layout)
    weight: (nOut, 1, k, k)  PyTorch grouped-conv weight layout (nOut % nIn == 0)
    """
    N, nIn, H, W = x.shape
    nOut, _, k, k2 = weight.shape
    assert k == k2
    assert nOut % nIn == 0
    mult = nOut // nIn
    p = (k - 1) // 2
    # TODO(synk): stride > 1 would need strided output windows; module default is 1.
    assert stride == 1, "only stride=1 implemented"

    KK = k * k
    C_BLK = 128
    C_pad = _round_up(nOut, C_BLK)
    n_cblk = C_pad // C_BLK

    # NCHW -> NHWC (channels on lanes).
    x_nhwc = jnp.transpose(x, (0, 2, 3, 1))
    # Grouped conv with groups=nIn: output channel oc reads input channel oc // mult.
    # Replicate input channels so the kernel is purely per-channel (depthwise).
    # TODO(synk): for mult > 1 this re-reads each input channel mult times from HBM; a
    #             fused variant would block output channels by mult per input block.
    if mult > 1:
        x_nhwc = jnp.repeat(x_nhwc, mult, axis=-1)

    # Circular padding (== F.pad mode='circular' for p < H, W).
    # TODO(synk): could be folded into the kernel with rolled taps to avoid the extra HBM
    #             round-trip of the padded tensor.
    xp = jnp.pad(x_nhwc, ((0, 0), (p, p), (p, p), (0, 0)), mode="wrap")
    # Zero-pad channels up to a lane-dense multiple of 128.
    if C_pad > nOut:
        xp = jnp.pad(xp, ((0, 0), (0, 0), (0, 0), (0, C_pad - nOut)))
    xp = xp.astype(jnp.float32)
    Hp, Wp = H + 2 * p, W + 2 * p
    Ho, Wo = H, W  # stride == 1 circular conv keeps spatial size

    # Weights: (nOut, 1, k, k) -> (k*k, C_pad) vector weights in VMEM, one row per tap.
    w_taps = jnp.transpose(weight.reshape(nOut, KK), (1, 0)).astype(jnp.float32)
    if C_pad > nOut:
        w_taps = jnp.pad(w_taps, ((0, 0), (0, C_pad - nOut)))

    # TODO(synk): very large spatial maps (e.g. 768x1152 ClimateNet inputs) would need an
    #             additional H-blocking (halo) axis; full-plane tiles are used here.

    def kernel(xp_ref, w_ref, o_ref):
        # xp_ref: (Hp, Wp, C_BLK)  w_ref: (KK, C_BLK)  o_ref: (Ho, Wo, C_BLK)
        acc = jnp.zeros((Ho, Wo, C_BLK), jnp.float32)
        for dy in range(k):
            for dx in range(k):
                # Window read: offsets only touch the major (H) and sublane (W) axes,
                # lanes (channels) stay aligned.
                tap = xp_ref[pl.ds(dy, Ho), pl.ds(dx, Wo), :]
                wv = w_ref[pl.ds(dy * k + dx, 1), :]  # (1, C_BLK) lane vector
                acc = acc + tap * wv                   # lane-dense VPU multiply-add
        o_ref[...] = acc.astype(o_ref.dtype)           # single store per tile

    # Rough per-step VMEM need (double-buffered in/out tiles + weights); only raise the
    # scoped limit when the default would be exceeded (respects v7x's 64 MiB budget).
    tile_bytes = 4 * C_BLK * (Hp * Wp + Ho * Wo) * 2 + 4 * KK * C_BLK * 2
    cp_kwargs = dict(dimension_semantics=("parallel", "parallel"))
    if tile_bytes > 24 * 1024 * 1024:
        cp_kwargs["vmem_limit_bytes"] = int(min(tile_bytes * 1.5, 64 * 1024 * 1024))

    out_padded = pl.pallas_call(
        kernel,
        out_shape=jax.ShapeDtypeStruct((N, Ho, Wo, C_pad), jnp.float32),
        grid=(N, n_cblk),
        in_specs=[
            pl.BlockSpec((None, Hp, Wp, C_BLK), lambda n, c: (n, 0, 0, c)),
            pl.BlockSpec((KK, C_BLK), lambda n, c: (0, c)),
        ],
        out_specs=pl.BlockSpec((None, Ho, Wo, C_BLK), lambda n, c: (n, 0, 0, c)),
        compiler_params=pltpu.CompilerParams(**cp_kwargs),
        cost_estimate=pl.CostEstimate(
            flops=2 * N * nOut * Ho * Wo * KK,
            transcendentals=0,
            bytes_accessed=xp.size * 4 + w_taps.size * 4 + N * Ho * Wo * C_pad * 4,
        ),
    )(xp, w_taps)

    # Drop channel padding, back to NCHW.
    out = out_padded[..., :nOut]
    return jnp.transpose(out, (0, 3, 1, 2)).astype(x.dtype)


if __name__ == "__main__":
    # Small deterministic example consistent with ChannelWiseConv(nIn=4, nOut=4, kSize=3).
    key = jax.random.PRNGKey(0)
    kx, kw = jax.random.split(key)

    N, C, H, W = 2, 4, 16, 16
    kSize = 3
    nIn = nOut = C

    x = jax.random.normal(kx, (N, C, H, W), dtype=jnp.float32)
    # Conv2d(nIn, nOut, (k,k), groups=nIn, bias=False) -> weight shape (nOut, 1, k, k)
    weight = jax.random.normal(kw, (nOut, 1, kSize, kSize), dtype=jnp.float32) * 0.1

    out = channel_wise_conv(x, weight, stride=1)
    out = jax.block_until_ready(out)

    # Reference: same circular pad + grouped conv via lax.
    p = (kSize - 1) // 2
    xp_ref_in = jnp.pad(x, ((0, 0), (0, 0), (p, p), (p, p)), mode="wrap")
    ref = jax.lax.conv_general_dilated(
        xp_ref_in, weight, window_strides=(1, 1), padding="VALID",
        feature_group_count=nIn,
        dimension_numbers=("NCHW", "OIHW", "NCHW"))
    assert out.shape == (N, nOut, H, W)
    assert jnp.allclose(out, ref, atol=1e-5, rtol=1e-5), "mismatch vs lax reference"

    print("KERNEL_OK")
</pallas_src>

<mosaic_0001>
module attributes {stable_mosaic.version = 11 : i64} {
  func.func @kernel(%arg0: i32, %arg1: i32, %arg2: memref<1x18x18x128xf32, #tpu.memory_space<vmem>>, %arg3: memref<9x128xf32, #tpu.memory_space<vmem>>, %arg4: memref<1x16x16x128xf32, #tpu.memory_space<vmem>>) attributes {dimension_semantics = [#tpu.dimension_semantics<parallel>, #tpu.dimension_semantics<parallel>], iteration_bounds = array<i64: 2, 1>, scalar_prefetch = 0 : i64, scratch_operands = 0 : i64, tpu.core_type = #tpu.core_type<tc>, window_params = [{transform_indices = @transform_0, window_bounds = array<i64: 1, 18, 18, 128>}, {transform_indices = @transform_1, window_bounds = array<i64: 9, 128>}, {transform_indices = @transform_2, window_bounds = array<i64: 1, 16, 16, 128>}]} {
    %cst = arith.constant 0.000000e+00 : f32
    %0 = vector.broadcast %cst : f32 to vector<16x16x128xf32>
    %c0 = arith.constant 0 : index
    %c0_0 = arith.constant 0 : index
    %c0_1 = arith.constant 0 : index
    %c0_2 = arith.constant 0 : index
    %1 = vector.load %arg2[%c0, %c0_0, %c0_1, %c0_2] : memref<1x18x18x128xf32, #tpu.memory_space<vmem>>, vector<1x16x16x128xf32>
    %2 = vector.shape_cast %1 : vector<1x16x16x128xf32> to vector<16x16x128xf32>
    %c0_3 = arith.constant 0 : index
    %c0_4 = arith.constant 0 : index
    %3 = vector.load %arg3[%c0_3, %c0_4] : memref<9x128xf32, #tpu.memory_space<vmem>>, vector<1x128xf32>
    %4 = vector.shape_cast %3 : vector<1x128xf32> to vector<1x1x128xf32>
    %5 = vector.broadcast %4 : vector<1x1x128xf32> to vector<16x16x128xf32>
    %6 = arith.mulf %2, %5 : vector<16x16x128xf32>
    %7 = arith.addf %0, %6 : vector<16x16x128xf32>
    %c0_5 = arith.constant 0 : index
    %c0_6 = arith.constant 0 : index
    %c1 = arith.constant 1 : index
    %c0_7 = arith.constant 0 : index
    %8 = vector.load %arg2[%c0_5, %c0_6, %c1, %c0_7] : memref<1x18x18x128xf32, #tpu.memory_space<vmem>>, vector<1x16x16x128xf32>
    %9 = vector.shape_cast %8 : vector<1x16x16x128xf32> to vector<16x16x128xf32>
    %c1_8 = arith.constant 1 : index
    %c0_9 = arith.constant 0 : index
    %10 = vector.load %arg3[%c1_8, %c0_9] : memref<9x128xf32, #tpu.memory_space<vmem>>, vector<1x128xf32>
    %11 = vector.shape_cast %10 : vector<1x128xf32> to vector<1x1x128xf32>
    %12 = vector.broadcast %11 : vector<1x1x128xf32> to vector<16x16x128xf32>
    %13 = arith.mulf %9, %12 : vector<16x16x128xf32>
    %14 = arith.addf %7, %13 : vector<16x16x128xf32>
    %c0_10 = arith.constant 0 : index
    %c0_11 = arith.constant 0 : index
    %c2 = arith.constant 2 : index
    %c0_12 = arith.constant 0 : index
    %15 = vector.load %arg2[%c0_10, %c0_11, %c2, %c0_12] : memref<1x18x18x128xf32, #tpu.memory_space<vmem>>, vector<1x16x16x128xf32>
    %16 = vector.shape_cast %15 : vector<1x16x16x128xf32> to vector<16x16x128xf32>
    %c2_13 = arith.constant 2 : index
    %c0_14 = arith.constant 0 : index
    %17 = vector.load %arg3[%c2_13, %c0_14] : memref<9x128xf32, #tpu.memory_space<vmem>>, vector<1x128xf32>
    %18 = vector.shape_cast %17 : vector<1x128xf32> to vector<1x1x128xf32>
    %19 = vector.broadcast %18 : vector<1x1x128xf32> to vector<16x16x128xf32>
    %20 = arith.mulf %16, %19 : vector<16x16x128xf32>
    %21 = arith.addf %14, %20 : vector<16x16x128xf32>
    %c0_15 = arith.constant 0 : index
    %c1_16 = arith.constant 1 : index
    %c0_17 = arith.constant 0 : index
    %c0_18 = arith.constant 0 : index
    %22 = vector.load %arg2[%c0_15, %c1_16, %c0_17, %c0_18] : memref<1x18x18x128xf32, #tpu.memory_space<vmem>>, vector<1x16x16x128xf32>
    %23 = vector.shape_cast %22 : vector<1x16x16x128xf32> to vector<16x16x128xf32>
    %c3 = arith.constant 3 : index
    %c0_19 = arith.constant 0 : index
    %24 = vector.load %arg3[%c3, %c0_19] : memref<9x128xf32, #tpu.memory_space<vmem>>, vector<1x128xf32>
    %25 = vector.shape_cast %24 : vector<1x128xf32> to vector<1x1x128xf32>
    %26 = vector.broadcast %25 : vector<1x1x128xf32> to vector<16x16x128xf32>
    %27 = arith.mulf %23, %26 : vector<16x16x128xf32>
    %28 = arith.addf %21, %27 : vector<16x16x128xf32>
    %c0_20 = arith.constant 0 : index
    %c1_21 = arith.constant 1 : index
    %c1_22 = arith.constant 1 : index
    %c0_23 = arith.constant 0 : index
    %29 = vector.load %arg2[%c0_20, %c1_21, %c1_22, %c0_23] : memref<1x18x18x128xf32, #tpu.memory_space<vmem>>, vector<1x16x16x128xf32>
    %30 = vector.shape_cast %29 : vector<1x16x16x128xf32> to vector<16x16x128xf32>
    %c4 = arith.constant 4 : index
    %c0_24 = arith.constant 0 : index
    %31 = vector.load %arg3[%c4, %c0_24] : memref<9x128xf32, #tpu.memory_space<vmem>>, vector<1x128xf32>
    %32 = vector.shape_cast %31 : vector<1x128xf32> to vector<1x1x128xf32>
    %33 = vector.broadcast %32 : vector<1x1x128xf32> to vector<16x16x128xf32>
    %34 = arith.mulf %30, %33 : vector<16x16x128xf32>
    %35 = arith.addf %28, %34 : vector<16x16x128xf32>
    %c0_25 = arith.constant 0 : index
    %c1_26 = arith.constant 1 : index
    %c2_27 = arith.constant 2 : index
    %c0_28 = arith.constant 0 : index
    %36 = vector.load %arg2[%c0_25, %c1_26, %c2_27, %c0_28] : memref<1x18x18x128xf32, #tpu.memory_space<vmem>>, vector<1x16x16x128xf32>
    %37 = vector.shape_cast %36 : vector<1x16x16x128xf32> to vector<16x16x128xf32>
    %c5 = arith.constant 5 : index
    %c0_29 = arith.constant 0 : index
    %38 = vector.load %arg3[%c5, %c0_29] : memref<9x128xf32, #tpu.memory_space<vmem>>, vector<1x128xf32>
    %39 = vector.shape_cast %38 : vector<1x128xf32> to vector<1x1x128xf32>
    %40 = vector.broadcast %39 : vector<1x1x128xf32> to vector<16x16x128xf32>
    %41 = arith.mulf %37, %40 : vector<16x16x128xf32>
    %42 = arith.addf %35, %41 : vector<16x16x128xf32>
    %c0_30 = arith.constant 0 : index
    %c2_31 = arith.constant 2 : index
    %c0_32 = arith.constant 0 : index
    %c0_33 = arith.constant 0 : index
    %43 = vector.load %arg2[%c0_30, %c2_31, %c0_32, %c0_33] : memref<1x18x18x128xf32, #tpu.memory_space<vmem>>, vector<1x16x16x128xf32>
    %44 = vector.shape_cast %43 : vector<1x16x16x128xf32> to vector<16x16x128xf32>
    %c6 = arith.constant 6 : index
    %c0_34 = arith.constant 0 : index
    %45 = vector.load %arg3[%c6, %c0_34] : memref<9x128xf32, #tpu.memory_space<vmem>>, vector<1x128xf32>
    %46 = vector.shape_cast %45 : vector<1x128xf32> to vector<1x1x128xf32>
    %47 = vector.broadcast %46 : vector<1x1x128xf32> to vector<16x16x128xf32>
    %48 = arith.mulf %44, %47 : vector<16x16x128xf32>
    %49 = arith.addf %42, %48 : vector<16x16x128xf32>
    %c0_35 = arith.constant 0 : index
    %c2_36 = arith.constant 2 : index
    %c1_37 = arith.constant 1 : index
    %c0_38 = arith.constant 0 : index
    %50 = vector.load %arg2[%c0_35, %c2_36, %c1_37, %c0_38] : memref<1x18x18x128xf32, #tpu.memory_space<vmem>>, vector<1x16x16x128xf32>
    %51 = vector.shape_cast %50 : vector<1x16x16x128xf32> to vector<16x16x128xf32>
    %c7 = arith.constant 7 : index
    %c0_39 = arith.constant 0 : index
    %52 = vector.load %arg3[%c7, %c0_39] : memref<9x128xf32, #tpu.memory_space<vmem>>, vector<1x128xf32>
    %53 = vector.shape_cast %52 : vector<1x128xf32> to vector<1x1x128xf32>
    %54 = vector.broadcast %53 : vector<1x1x128xf32> to vector<16x16x128xf32>
    %55 = arith.mulf %51, %54 : vector<16x16x128xf32>
    %56 = arith.addf %49, %55 : vector<16x16x128xf32>
    %c0_40 = arith.constant 0 : index
    %c2_41 = arith.constant 2 : index
    %c2_42 = arith.constant 2 : index
    %c0_43 = arith.constant 0 : index
    %57 = vector.load %arg2[%c0_40, %c2_41, %c2_42, %c0_43] : memref<1x18x18x128xf32, #tpu.memory_space<vmem>>, vector<1x16x16x128xf32>
    %58 = vector.shape_cast %57 : vector<1x16x16x128xf32> to vector<16x16x128xf32>
    %c8 = arith.constant 8 : index
    %c0_44 = arith.constant 0 : index
    %59 = vector.load %arg3[%c8, %c0_44] : memref<9x128xf32, #tpu.memory_space<vmem>>, vector<1x128xf32>
    %60 = vector.shape_cast %59 : vector<1x128xf32> to vector<1x1x128xf32>
    %61 = vector.broadcast %60 : vector<1x1x128xf32> to vector<16x16x128xf32>
    %62 = arith.mulf %58, %61 : vector<16x16x128xf32>
    %63 = arith.addf %56, %62 : vector<16x16x128xf32>
    %c0_45 = arith.constant 0 : index
    %c0_46 = arith.constant 0 : index
    %c0_47 = arith.constant 0 : index
    %c0_48 = arith.constant 0 : index
    %64 = vector.load %arg4[%c0_45, %c0_46, %c0_47, %c0_48] : memref<1x16x16x128xf32, #tpu.memory_space<vmem>>, vector<1x16x16x128xf32>
    %65 = vector.shape_cast %64 : vector<1x16x16x128xf32> to vector<16x16x128xf32>
    %66 = vector.shape_cast %63 : vector<16x16x128xf32> to vector<1x16x16x128xf32>
    tpu.vector_store %arg4[%c0_45, %c0_46, %c0_47, %c0_48], %66 {strides = array<i32>} : memref<1x16x16x128xf32, #tpu.memory_space<vmem>>, vector<1x16x16x128xf32>,
    return
  }
  func.func @transform_0(%arg0: i32, %arg1: i32) -> (i32, i32, i32, i32) {
    %c0_i32 = arith.constant 0 : i32
    %c0_i32_0 = arith.constant 0 : i32
    %c0_i32_1 = arith.constant 0 : i32
    return %arg0, %c0_i32, %c0_i32_0, %arg1 : i32, i32, i32, i32
  }
  func.func @transform_1(%arg0: i32, %arg1: i32) -> (i32, i32) {
    %c0_i32 = arith.constant 0 : i32
    %c0_i32_0 = arith.constant 0 : i32
    return %c0_i32, %arg1 : i32, i32
  }
  func.func @transform_2(%arg0: i32, %arg1: i32) -> (i32, i32, i32, i32) {
    %c0_i32 = arith.constant 0 : i32
    %c0_i32_0 = arith.constant 0 : i32
    %c0_i32_1 = arith.constant 0 : i32
    return %arg0, %c0_i32, %c0_i32_0, %arg1 : i32, i32, i32, i32
  }
}

</mosaic_0001>

<llo_original>
// kernel: tpu_custom_call.1
$region0: #{tpu_custom_call.1}
  #allocation0 [shape = 'u32[]', space=smem, size = 0x4, offset = 0x4, fixed_abs, tag = 'smem constant byte address 0x4 - core index']
  #allocation1 [shape = 'u32[144,128]{1,0:T(1,128)}', space=vmem, size = 0x12000, scoped, tag = 'internal scratch']
  %s0 = inlined_call_operand.vmem [shape: f32[2,18,18,128], index: 0, kind: input, shape index: {}]
  %s1 = inlined_call_operand.vmem [shape: f32[9,128], index: 1, kind: input, shape index: {}]
  %s2 = inlined_call_operand.hbm [shape: f32[2,16,16,128], index: 2, kind: output, shape index: {}]
  %s3 = sld [smem:[#allocation0]]
  $region41: #{tpu_custom_call.1} parent=0
    _
  %s5 = ssub.s32 1, %s3
  %s6 = scalar_select 0, %s5, %s3
  $region1: #{tpu_custom_call.1} parent=0
    #allocation2 [shape = 'u8[262144]{0}', space=vmem, size = 0x40000, scoped, tag = 'output window, operand 0']
    #allocation3 [shape = 's32[2]{0}', space=sflag, size = 0x8, scoped, tag = 'scoped memory for tpu_custom_call.1']
    %7 = vsyncpa [#allocation3], 0
    %s8 = scalar_lea.sflag [#allocation3], 1
    %9 = vsyncpa %s8, 0
    loop: start=0, step=1, limit=4
    $region2: #{tpu_custom_call.1} parent=1 // loop_pre_header
      _
    $region3: #{tpu_custom_call.1} parent=1 // loop_header
      %s11 = sphi 0, %s15
      %p12 = scmp.ge.s32.totalorder %s11, 4
      %s18 = sphi 0, %s30
      %s19 = sphi 0, %s26
      %s20 = sphi 0, %s18
      %s21 = sphi 0, %s19
      %s22 = sphi 0, %s20
      %s23 = sphi 0, %s21
      %s35 = sphi 0, %s37
      %s38 = sphi 0, %s35
      %s39 = sphi 0, %s38
      %s55 = sphi 0, %s39
      %s61 = sphi 0, %s63
      %s64 = sphi 0, %s61
      %s65 = sphi 0, %s64
      %s81 = sphi 0, %s65
      %s89 = sphi 0, %s91
      %s92 = sphi 0, %s89
      %s93 = sphi 0, %s92
      %s109 = sphi 0, %s93
    $region4: #{tpu_custom_call.1} parent=1 // loop_header_branch
      %14 = sbr.rel (%p12) target = $region8
    $region5: #{tpu_custom_call.1} parent=1 // loop_body
      %s16 = ssub.s32 %s11, 1
      %s17 = ssub.s32 %s11, 2
      %s24 = sadd.s32 1, %s19
      %p25 = scmp.ge.s32.totalorder %s24, 1
      %s26 = scalar_select %p25, 0, %s24
      %s27 = sadd.s32 1, %s18
      %s28 = scalar_select %p25, %s27, %s18
      %p29 = scmp.ge.s32.totalorder %s28, 2
      %s30 = scalar_select %p29, 0, %s28
      %s31 = ssub.s32 %s18, %s30
      %s32 = ssub.s32 %s19, %s26
      %s33 = sor.u32 %s31, %s32
      %p34 = scmp.eq.s32.totalorder %s33, 0
      %s36 = sadd.s32 %s35, 1
      %s37 = scalar_select %p34, %s35, %s36
      %p40 = pneg %p34
      %p41 = scmp.eq.s32.totalorder %s11, 1
      %p42 = por %p40, %p41
      %p43 = scmp.ne.s32.totalorder %s35, %s38
      %p44 = scmp.eq.s32.totalorder %s11, 0
      %p45 = por %p43, %p44
      %p46 = scmp.ne.s32.totalorder %s35, %s38
      %p47 = scmp.eq.s32.totalorder %s16, 1
      %p48 = por %p46, %p47
      %p49 = scmp.ne.s32.totalorder %s38, %s39
      %p50 = scmp.eq.s32.totalorder %s16, 0
      %p51 = por %p49, %p50
      %p52 = scmp.ne.s32.totalorder %s38, %s39
      %p53 = scmp.eq.s32.totalorder %s17, 1
      %p54 = por %p52, %p53
      %p56 = scmp.ne.s32.totalorder %s39, %s55
      %p57 = scmp.eq.s32.totalorder %s17, 0
      %p58 = por %p56, %p57
      %s59 = ssub.s32 %s19, %s26
      %p60 = scmp.eq.s32.totalorder %s59, 0
      %s62 = sadd.s32 %s61, 1
      %s63 = scalar_select %p60, %s61, %s62
      %p66 = pneg %p60
      %p67 = scmp.eq.s32.totalorder %s11, 1
      %p68 = por %p66, %p67
      %p69 = scmp.ne.s32.totalorder %s61, %s64
      %p70 = scmp.eq.s32.totalorder %s11, 0
      %p71 = por %p69, %p70
      %p72 = scmp.ne.s32.totalorder %s61, %s64
      %p73 = scmp.eq.s32.totalorder %s16, 1
      %p74 = por %p72, %p73
      %p75 = scmp.ne.s32.totalorder %s64, %s65
      %p76 = scmp.eq.s32.totalorder %s16, 0
      %p77 = por %p75, %p76
      %p78 = scmp.ne.s32.totalorder %s64, %s65
      %p79 = scmp.eq.s32.totalorder %s17, 1
      %p80 = por %p78, %p79
      %p82 = scmp.ne.s32.totalorder %s65, %s81
      %p83 = scmp.eq.s32.totalorder %s17, 0
      %p84 = por %p82, %p83
      %s85 = ssub.s32 %s18, %s30
      %s86 = ssub.s32 %s19, %s26
      %s87 = sor.u32 %s85, %s86
      %p88 = scmp.eq.s32.totalorder %s87, 0
      %s90 = sadd.s32 %s89, 1
      %s91 = scalar_select %p88, %s89, %s90
      %p94 = pneg %p88
      %p95 = scmp.eq.s32.totalorder %s11, 1
      %p96 = por %p94, %p95
      %p97 = scmp.ne.s32.totalorder %s89, %s92
      %p98 = scmp.eq.s32.totalorder %s11, 0
      %p99 = por %p97, %p98
      %p100 = scmp.ne.s32.totalorder %s89, %s92
      %p101 = scmp.eq.s32.totalorder %s16, 1
      %p102 = por %p100, %p101
      %p103 = scmp.ne.s32.totalorder %s92, %s93
      %p104 = scmp.eq.s32.totalorder %s16, 0
      %p105 = por %p103, %p104
      %p106 = scmp.ne.s32.totalorder %s92, %s93
      %p107 = scmp.eq.s32.totalorder %s17, 1
      %p108 = por %p106, %p107
      %p110 = scmp.ne.s32.totalorder %s93, %s109
      %p111 = scmp.eq.s32.totalorder %s17, 0
      %p112 = por %p110, %p111
      %p113 = scmp.le.s32.totalorder 1, %s11
      %p114 = scmp.lt.s32.totalorder %s11, 3
      %p115 = pnand %p113, %p114
      %p116 = pneg %p115
      // Predicated region
      $region9: #{tpu_custom_call.1} parent=5 // pred_check
        _
      $region10: #{tpu_custom_call.1} parent=5 // pred_check_branch
        %118 = sbr.rel (%p115) target = $region12
      $region11: #{tpu_custom_call.1} parent=5 // pred_region
        %s119 = ssub.s32 %s11, 1
        // Predicated region
        $region13: #{tpu_custom_call.1} parent=11 // pred_check
          %p120 = pneg %p77
        $region14: #{tpu_custom_call.1} parent=11 // pred_check_branch
          %122 = sbr.rel (%p120) target = $region16
        $region15: #{tpu_custom_call.1} parent=11 // pred_region
          %p123 = scmp.lt.s32.totalorder %s21, 0
          %s124 = scalar_select %p123, %s21, 0
          %s125 = smul.addr %s124, 8
          %s126 = scalar_lea.vmem %s1, %s125
        $region16: #{tpu_custom_call.1} parent=11 // pred_fallthru
          _
      $region12: #{tpu_custom_call.1} parent=5 // pred_fallthru
        _
      %p127 = scmp.lt.s32.totalorder %s11, 2
      // Predicated region
      $region17: #{tpu_custom_call.1} parent=5 // pred_check
        %p128 = pneg %p127
      $region18: #{tpu_custom_call.1} parent=5 // pred_check_branch
        %130 = sbr.rel (%p128) target = $region20
      $region19: #{tpu_custom_call.1} parent=5 // pred_region
        // Predicated region
        $region21: #{tpu_custom_call.1} parent=19 // pred_check
          %p131 = pneg %p45
        $region22: #{tpu_custom_call.1} parent=19 // pred_check_branch
          %133 = sbr.rel (%p131) target = $region24
        $region23: #{tpu_custom_call.1} parent=19 // pred_region
          %p134 = scmp.lt.s32.totalorder %s18, 1
          %s135 = scalar_select %p134, %s18, 1
          %p136 = scmp.lt.s32.totalorder %s19, 0
          %s137 = scalar_select %p136, %s19, 0
          %s138 = smul.addr %s135, 54
          %s139 = sadd.s32 %s137, %s138
          %s140 = smul.addr %s139, 8
          %s141 = scalar_lea.vmem %s0, %s140
        $region24: #{tpu_custom_call.1} parent=19 // pred_fallthru
          _
      $region20: #{tpu_custom_call.1} parent=5 // pred_fallthru
        _
      %p142 = scmp.le.s32.totalorder 1, %s11
      %p143 = scmp.lt.s32.totalorder %s11, 3
      %p144 = pnand %p142, %p143
      %p145 = pneg %p144
      // Predicated region
      $region25: #{tpu_custom_call.1} parent=5 // pred_check
        _
      $region26: #{tpu_custom_call.1} parent=5 // pred_check_branch
        %147 = sbr.rel (%p144) target = $region28
      $region27: #{tpu_custom_call.1} parent=5 // pred_region
        %s148 = ssub.s32 %s11, 1
        %p149 = scmp.lt.s32.totalorder %s20, 1
        %s150 = scalar_select %p149, %s20, 1
        %p151 = scmp.lt.s32.totalorder %s21, 0
        %s152 = scalar_select %p151, %s21, 0
        %s153 = smul.addr %s150, 54
        %s154 = sadd.s32 %s152, %s153
        %s155 = smul.addr %s154, 8
        %s156 = scalar_lea.vmem %s0, %s155
        %p157 = pneg %p51
        %p158 = pneg %p48
        %p159 = scmp.lt.s32.totalorder %s21, 0
        %s160 = scalar_select %p159, %s21, 0
        %s161 = smul.addr %s160, 8
        %s162 = scalar_lea.vmem %s1, %s161
        %p163 = pneg %p77
        %p164 = pneg %p74
        %p165 = pneg %p105
        %p166 = pneg %p102
        %s167 = sand.u32 %s92, 1
        %s168 = scalar_lea.sflag [#allocation3], %s167
        %s169 = sand.u32 %s92, 1
        %s170 = smul.addr %s169, 256
        %s171 = scalar_lea.vmem [#allocation2], %s170
        %p172 = scmp.lt.s32.totalorder %s20, 1
        %s173 = scalar_select %p172, %s20, 1
        %p174 = scmp.lt.s32.totalorder %s21, 0
        %s175 = scalar_select %p174, %s21, 0
        %s176 = smul.addr %s173, 54
        %s177 = sadd.s32 %s175, %s176
        %s178 = smul.addr %s177, 8
        %s179 = scalar_lea.vmem %s0, %s178
        %p180 = scmp.lt.s32.totalorder %s21, 0
        %s181 = scalar_select %p180, %s21, 0
        %s182 = smul.addr %s181, 8
        %s183 = scalar_lea.vmem %s1, %s182
        %v184 = vld [vmem:[%s179] sm:$0xff]
        %v185 = vld [vmem:[%s179 + $0x8] sm:$0xff]
        %v186 = vld [vmem:[%s179 + $0x18] sm:$0xff]
        %v187 = vld [vmem:[%s179 + $0x20] sm:$0xff]
        %v188 = vld [vmem:[%s179 + $0x30] sm:$0xff]
        %v189 = vld [vmem:[%s179 + $0x38] sm:$0xff]
        %v190 = vld [vmem:[%s179 + $0x48] sm:$0xff]
        %v191 = vld [vmem:[%s179 + $0x50] sm:$0xff]
        %v192 = vld [vmem:[%s179 + $0x60] sm:$0xff]
        %v193 = vld [vmem:[%s179 + $0x68] sm:$0xff]
        %v194 = vld [vmem:[%s179 + $0x78] sm:$0xff]
        %v195 = vld [vmem:[%s179 + $0x80] sm:$0xff]
        %v196 = vld [vmem:[%s179 + $0x90] sm:$0xff]
        %v197 = vld [vmem:[%s179 + $0x98] sm:$0xff]
        %v198 = vld [vmem:[%s179 + $0xa8] sm:$0xff]
        %v199 = vld [vmem:[%s179 + $0xb0] sm:$0xff]
        %v200 = vld [vmem:[%s179 + $0xc0] sm:$0xff]
        %v201 = vld [vmem:[%s179 + $0xc8] sm:$0xff]
        %v202 = vld [vmem:[%s179 + $0xd8] sm:$0xff]
        %v203 = vld [vmem:[%s179 + $0xe0] sm:$0xff]
        %v204 = vld [vmem:[%s179 + $0xf0] sm:$0xff]
        %v205 = vld [vmem:[%s179 + $0xf8] sm:$0xff]
        %v206 = vld [vmem:[%s179 + $0x108] sm:$0xff]
        %v207 = vld [vmem:[%s179 + $0x110] sm:$0xff]
        %v208 = vld [vmem:[%s179 + $0x120] sm:$0xff]
        %v209 = vld [vmem:[%s179 + $0x128] sm:$0xff]
        %v210 = vld [vmem:[%s179 + $0x138] sm:$0xff]
        %v211 = vld [vmem:[%s179 + $0x140] sm:$0xff]
        %v212 = vld [vmem:[%s179 + $0x150] sm:$0xff]
        %v213 = vld [vmem:[%s179 + $0x158] sm:$0xff]
        %v214 = vld [vmem:[%s179 + $0x168] sm:$0xff]
        %v215 = vld [vmem:[%s179 + $0x170] sm:$0xff]
        %v216 = vld [vmem:[%s183] sm:$0x1]
        %v217 = vlaneseq
        %v218 = vshrl.u32 %v217, 7
        %v219 = vsub.s32 0, %v218
        %v220 = vrot.slane %v216, %v219
        %v221 = vmul.f32 %v184, %v220
        %v222 = vmul.f32 %v185, %v220
        %v223 = vmul.f32 %v186, %v220
        %v224 = vmul.f32 %v187, %v220
        %v225 = vmul.f32 %v188, %v220
        %v226 = vmul.f32 %v189, %v220
        %v227 = vmul.f32 %v190, %v220
        %v228 = vmul.f32 %v191, %v220
        %v229 = vmul.f32 %v192, %v220
        %v230 = vmul.f32 %v193, %v220
        %v231 = vmul.f32 %v194, %v220
        %v232 = vmul.f32 %v195, %v220
        %v233 = vmul.f32 %v196, %v220
        %v234 = vmul.f32 %v197, %v220
        %v235 = vmul.f32 %v198, %v220
        %v236 = vmul.f32 %v199, %v220
        %v237 = vmul.f32 %v200, %v220
        %v238 = vmul.f32 %v201, %v220
        %v239 = vmul.f32 %v202, %v220
        %v240 = vmul.f32 %v203, %v220
        %v241 = vmul.f32 %v204, %v220
        %v242 = vmul.f32 %v205, %v220
        %v243 = vmul.f32 %v206, %v220
        %v244 = vmul.f32 %v207, %v220
        %v245 = vmul.f32 %v208, %v220
        %v246 = vmul.f32 %v209, %v220
        %v247 = vmul.f32 %v210, %v220
        %v248 = vmul.f32 %v211, %v220
        %v249 = vmul.f32 %v212, %v220
        %v250 = vmul.f32 %v213, %v220
        %v251 = vmul.f32 %v214, %v220
        %v252 = vmul.f32 %v215, %v220
        %v253 = vadd.f32 %v221, 0.0
        %v254 = vadd.f32 %v222, 0.0
        %v255 = vadd.f32 %v223, 0.0
        %v256 = vadd.f32 %v224, 0.0
        %v257 = vadd.f32 %v225, 0.0
        %v258 = vadd.f32 %v226, 0.0
        %v259 = vadd.f32 %v227, 0.0
        %v260 = vadd.f32 %v228, 0.0
        %v261 = vadd.f32 %v229, 0.0
        %v262 = vadd.f32 %v230, 0.0
        %v263 = vadd.f32 %v231, 0.0
        %v264 = vadd.f32 %v232, 0.0
        %v265 = vadd.f32 %v233, 0.0
        %v266 = vadd.f32 %v234, 0.0
        %v267 = vadd.f32 %v235, 0.0
        %v268 = vadd.f32 %v236, 0.0
        %v269 = vadd.f32 %v237, 0.0
        %v270 = vadd.f32 %v238, 0.0
        %v271 = vadd.f32 %v239, 0.0
        %v272 = vadd.f32 %v240, 0.0
        %v273 = vadd.f32 %v241, 0.0
        %v274 = vadd.f32 %v242, 0.0
        %v275 = vadd.f32 %v243, 0.0
        %v276 = vadd.f32 %v244, 0.0
        %v277 = vadd.f32 %v245, 0.0
        %v278 = vadd.f32 %v246, 0.0
        %v279 = vadd.f32 %v247, 0.0
        %v280 = vadd.f32 %v248, 0.0
        %v281 = vadd.f32 %v249, 0.0
        %v282 = vadd.f32 %v250, 0.0
        %v283 = vadd.f32 %v251, 0.0
        %v284 = vadd.f32 %v252, 0.0
        %v285 = vld [vmem:[%s179 + $0x1] sm:$0xff]
        %v286 = vld [vmem:[%s179 + $0x9] sm:$0xff]
        %v287 = vld [vmem:[%s179 + $0x19] sm:$0xff]
        %v288 = vld [vmem:[%s179 + $0x21] sm:$0xff]
        %v289 = vld [vmem:[%s179 + $0x31] sm:$0xff]
        %v290 = vld [vmem:[%s179 + $0x39] sm:$0xff]
        %v291 = vld [vmem:[%s179 + $0x49] sm:$0xff]
        %v292 = vld [vmem:[%s179 + $0x51] sm:$0xff]
        %v293 = vld [vmem:[%s179 + $0x61] sm:$0xff]
        %v294 = vld [vmem:[%s179 + $0x69] sm:$0xff]
        %v295 = vld [vmem:[%s179 + $0x79] sm:$0xff]
        %v296 = vld [vmem:[%s179 + $0x81] sm:$0xff]
        %v297 = vld [vmem:[%s179 + $0x91] sm:$0xff]
        %v298 = vld [vmem:[%s179 + $0x99] sm:$0xff]
        %v299 = vld [vmem:[%s179 + $0xa9] sm:$0xff]
        %v300 = vld [vmem:[%s179 + $0xb1] sm:$0xff]
        %v301 = vld [vmem:[%s179 + $0xc1] sm:$0xff]
        %v302 = vld [vmem:[%s179 + $0xc9] sm:$0xff]
        %v303 = vld [vmem:[%s179 + $0xd9] sm:$0xff]
        %v304 = vld [vmem:[%s179 + $0xe1] sm:$0xff]
        %v305 = vld [vmem:[%s179 + $0xf1] sm:$0xff]
        %v306 = vld [vmem:[%s179 + $0xf9] sm:$0xff]
        %v307 = vld [vmem:[%s179 + $0x109] sm:$0xff]
        %v308 = vld [vmem:[%s179 + $0x111] sm:$0xff]
        %v309 = vld [vmem:[%s179 + $0x121] sm:$0xff]
        %v310 = vld [vmem:[%s179 + $0x129] sm:$0xff]
        %v311 = vld [vmem:[%s179 + $0x139] sm:$0xff]
        %v312 = vld [vmem:[%s179 + $0x141] sm:$0xff]
        %v313 = vld [vmem:[%s179 + $0x151] sm:$0xff]
        %v314 = vld [vmem:[%s179 + $0x159] sm:$0xff]
        %v315 = vld [vmem:[%s179 + $0x169] sm:$0xff]
        %v316 = vld [vmem:[%s179 + $0x171] sm:$0xff]
        %v317 = vld [vmem:[%s183 + $0x1] sm:$0x1]
        %v318 = vlaneseq
        %v319 = vshrl.u32 %v318, 7
        %v320 = vsub.s32 0, %v319
        %v321 = vrot.slane %v317, %v320
        %v322 = vmul.f32 %v285, %v321
        %v323 = vmul.f32 %v286, %v321
        %v324 = vmul.f32 %v287, %v321
        %v325 = vmul.f32 %v288, %v321
        %v326 = vmul.f32 %v289, %v321
        %v327 = vmul.f32 %v290, %v321
        %v328 = vmul.f32 %v291, %v321
        %v329 = vmul.f32 %v292, %v321
        %v330 = vmul.f32 %v293, %v321
        %v331 = vmul.f32 %v294, %v321
        %v332 = vmul.f32 %v295, %v321
        %v333 = vmul.f32 %v296, %v321
        %v334 = vmul.f32 %v297, %v321
        %v335 = vmul.f32 %v298, %v321
        %v336 = vmul.f32 %v299, %v321
        %v337 = vmul.f32 %v300, %v321
        %v338 = vmul.f32 %v301, %v321
        %v339 = vmul.f32 %v302, %v321
        %v340 = vmul.f32 %v303, %v321
        %v341 = vmul.f32 %v304, %v321
        %v342 = vmul.f32 %v305, %v321
        %v343 = vmul.f32 %v306, %v321
        %v344 = vmul.f32 %v307, %v321
        %v345 = vmul.f32 %v308, %v321
        %v346 = vmul.f32 %v309, %v321
        %v347 = vmul.f32 %v310, %v321
        %v348 = vmul.f32 %v311, %v321
        %v349 = vmul.f32 %v312, %v321
        %v350 = vmul.f32 %v313, %v321
        %v351 = vmul.f32 %v314, %v321
        %v352 = vmul.f32 %v315, %v321
        %v353 = vmul.f32 %v316, %v321
        %v354 = vadd.f32 %v253, %v322
        %v355 = vadd.f32 %v254, %v323
        %v356 = vadd.f32 %v255, %v324
        %v357 = vadd.f32 %v256, %v325
        %v358 = vadd.f32 %v257, %v326
        %v359 = vadd.f32 %v258, %v327
        %v360 = vadd.f32 %v259, %v328
        %v361 = vadd.f32 %v260, %v329
        %v362 = vadd.f32 %v261, %v330
        %v363 = vadd.f32 %v262, %v331
        %v364 = vadd.f32 %v263, %v332
        %v365 = vadd.f32 %v264, %v333
        %v366 = vadd.f32 %v265, %v334
        %v367 = vadd.f32 %v266, %v335
        %v368 = vadd.f32 %v267, %v336
        %v369 = vadd.f32 %v268, %v337
        %v370 = vadd.f32 %v269, %v338
        %v371 = vadd.f32 %v270, %v339
        %v372 = vadd.f32 %v271, %v340
        %v373 = vadd.f32 %v272, %v341
        %v374 = vadd.f32 %v273, %v342
        %v375 = vadd.f32 %v274, %v343
        %v376 = vadd.f32 %v275, %v344
        %v377 = vadd.f32 %v276, %v345
        %v378 = vadd.f32 %v277, %v346
        %v379 = vadd.f32 %v278, %v347
        %v380 = vadd.f32 %v279, %v348
        %v381 = vadd.f32 %v280, %v349
        %v382 = vadd.f32 %v281, %v350
        %v383 = vadd.f32 %v282, %v351
        %v384 = vadd.f32 %v283, %v352
        %v385 = vadd.f32 %v284, %v353
        %v386 = vld [vmem:[%s179 + $0x2] sm:$0xff]
        %v387 = vld [vmem:[%s179 + $0xa] sm:$0xff]
        %v388 = vld [vmem:[%s179 + $0x1a] sm:$0xff]
        %v389 = vld [vmem:[%s179 + $0x22] sm:$0xff]
        %v390 = vld [vmem:[%s179 + $0x32] sm:$0xff]
        %v391 = vld [vmem:[%s179 + $0x3a] sm:$0xff]
        %v392 = vld [vmem:[%s179 + $0x4a] sm:$0xff]
        %v393 = vld [vmem:[%s179 + $0x52] sm:$0xff]
        %v394 = vld [vmem:[%s179 + $0x62] sm:$0xff]
        %v395 = vld [vmem:[%s179 + $0x6a] sm:$0xff]
        %v396 = vld [vmem:[%s179 + $0x7a] sm:$0xff]
        %v397 = vld [vmem:[%s179 + $0x82] sm:$0xff]
        %v398 = vld [vmem:[%s179 + $0x92] sm:$0xff]
        %v399 = vld [vmem:[%s179 + $0x9a] sm:$0xff]
        %v400 = vld [vmem:[%s179 + $0xaa] sm:$0xff]
        %v401 = vld [vmem:[%s179 + $0xb2] sm:$0xff]
        %v402 = vld [vmem:[%s179 + $0xc2] sm:$0xff]
        %v403 = vld [vmem:[%s179 + $0xca] sm:$0xff]
        %v404 = vld [vmem:[%s179 + $0xda] sm:$0xff]
        %v405 = vld [vmem:[%s179 + $0xe2] sm:$0xff]
        %v406 = vld [vmem:[%s179 + $0xf2] sm:$0xff]
        %v407 = vld [vmem:[%s179 + $0xfa] sm:$0xff]
        %v408 = vld [vmem:[%s179 + $0x10a] sm:$0xff]
        %v409 = vld [vmem:[%s179 + $0x112] sm:$0xff]
        %v410 = vld [vmem:[%s179 + $0x122] sm:$0xff]
        %v411 = vld [vmem:[%s179 + $0x12a] sm:$0xff]
        %v412 = vld [vmem:[%s179 + $0x13a] sm:$0xff]
        %v413 = vld [vmem:[%s179 + $0x142] sm:$0xff]
        %v414 = vld [vmem:[%s179 + $0x152] sm:$0xff]
        %v415 = vld [vmem:[%s179 + $0x15a] sm:$0xff]
        %v416 = vld [vmem:[%s179 + $0x16a] sm:$0xff]
        %v417 = vld [vmem:[%s179 + $0x172] sm:$0xff]
        %v418 = vld [vmem:[%s183 + $0x2] sm:$0x1]
        %v419 = vlaneseq
        %v420 = vshrl.u32 %v419, 7
        %v421 = vsub.s32 0, %v420
        %v422 = vrot.slane %v418, %v421
        %v423 = vmul.f32 %v386, %v422
        %v424 = vmul.f32 %v387, %v422
        %v425 = vmul.f32 %v388, %v422
        %v426 = vmul.f32 %v389, %v422
        %v427 = vmul.f32 %v390, %v422
        %v428 = vmul.f32 %v391, %v422
        %v429 = vmul.f32 %v392, %v422
        %v430 = vmul.f32 %v393, %v422
        %v431 = vmul.f32 %v394, %v422
        %v432 = vmul.f32 %v395, %v422
        %v433 = vmul.f32 %v396, %v422
        %v434 = vmul.f32 %v397, %v422
        %v435 = vmul.f32 %v398, %v422
        %v436 = vmul.f32 %v399, %v422
        %v437 = vmul.f32 %v400, %v422
        %v438 = vmul.f32 %v401, %v422
        %v439 = vmul.f32 %v402, %v422
        %v440 = vmul.f32 %v403, %v422
        %v441 = vmul.f32 %v404, %v422
        %v442 = vmul.f32 %v405, %v422
        %v443 = vmul.f32 %v406, %v422
        %v444 = vmul.f32 %v407, %v422
        %v445 = vmul.f32 %v408, %v422
        %v446 = vmul.f32 %v409, %v422
        %v447 = vmul.f32 %v410, %v422
        %v448 = vmul.f32 %v411, %v422
        %v449 = vmul.f32 %v412, %v422
        %v450 = vmul.f32 %v413, %v422
        %v451 = vmul.f32 %v414, %v422
        %v452 = vmul.f32 %v415, %v422
        %v453 = vmul.f32 %v416, %v422
        %v454 = vmul.f32 %v417, %v422
        %v455 = vadd.f32 %v354, %v423
        %v456 = vadd.f32 %v355, %v424
        %v457 = vadd.f32 %v356, %v425
        %v458 = vadd.f32 %v357, %v426
        %v459 = vadd.f32 %v358, %v427
        %v460 = vadd.f32 %v359, %v428
        %v461 = vadd.f32 %v360, %v429
        %v462 = vadd.f32 %v361, %v430
        %v463 = vadd.f32 %v362, %v431
        %v464 = vadd.f32 %v363, %v432
        %v465 = vadd.f32 %v364, %v433
        %v466 = vadd.f32 %v365, %v434
        %v467 = vadd.f32 %v366, %v435
        %v468 = vadd.f32 %v367, %v436
        %v469 = vadd.f32 %v368, %v437
        %v470 = vadd.f32 %v369, %v438
        %v471 = vadd.f32 %v370, %v439
        %v472 = vadd.f32 %v371, %v440
        %v473 = vadd.f32 %v372, %v441
        %v474 = vadd.f32 %v373, %v442
        %v475 = vadd.f32 %v374, %v443
        %v476 = vadd.f32 %v375, %v444
        %v477 = vadd.f32 %v376, %v445
        %v478 = vadd.f32 %v377, %v446
        %v479 = vadd.f32 %v378, %v447
        %v480 = vadd.f32 %v379, %v448
        %v481 = vadd.f32 %v380, %v449
        %v482 = vadd.f32 %v381, %v450
        %v483 = vadd.f32 %v382, %v451
        %v484 = vadd.f32 %v383, %v452
        %v485 = vadd.f32 %v384, %v453
        %v486 = vadd.f32 %v385, %v454
        %s487 = scalar_lea.vmem %s179, 24
        %v488 = vld [vmem:[%s487] sm:$0xff]
        %v489 = vld [vmem:[%s487 + $0x8] sm:$0xff]
        %v490 = vld [vmem:[%s487 + $0x18] sm:$0xff]
        %v491 = vld [vmem:[%s487 + $0x20] sm:$0xff]
        %v492 = vld [vmem:[%s487 + $0x30] sm:$0xff]
        %v493 = vld [vmem:[%s487 + $0x38] sm:$0xff]
        %v494 = vld [vmem:[%s487 + $0x48] sm:$0xff]
        %v495 = vld [vmem:[%s487 + $0x50] sm:$0xff]
        %v496 = vld [vmem:[%s487 + $0x60] sm:$0xff]
        %v497 = vld [vmem:[%s487 + $0x68] sm:$0xff]
        %v498 = vld [vmem:[%s487 + $0x78] sm:$0xff]
        %v499 = vld [vmem:[%s487 + $0x80] sm:$0xff]
        %v500 = vld [vmem:[%s487 + $0x90] sm:$0xff]
        %v501 = vld [vmem:[%s487 + $0x98] sm:$0xff]
        %v502 = vld [vmem:[%s487 + $0xa8] sm:$0xff]
        %v503 = vld [vmem:[%s487 + $0xb0] sm:$0xff]
        %v504 = vld [vmem:[%s487 + $0xc0] sm:$0xff]
        %v505 = vld [vmem:[%s487 + $0xc8] sm:$0xff]
        %v506 = vld [vmem:[%s487 + $0xd8] sm:$0xff]
        %v507 = vld [vmem:[%s487 + $0xe0] sm:$0xff]
        %v508 = vld [vmem:[%s487 + $0xf0] sm:$0xff]
        %v509 = vld [vmem:[%s487 + $0xf8] sm:$0xff]
        %v510 = vld [vmem:[%s487 + $0x108] sm:$0xff]
        %v511 = vld [vmem:[%s487 + $0x110] sm:$0xff]
        %v512 = vld [vmem:[%s487 + $0x120] sm:$0xff]
        %v513 = vld [vmem:[%s487 + $0x128] sm:$0xff]
        %v514 = vld [vmem:[%s487 + $0x138] sm:$0xff]
        %v515 = vld [vmem:[%s487 + $0x140] sm:$0xff]
        %v516 = vld [vmem:[%s487 + $0x150] sm:$0xff]
        %v517 = vld [vmem:[%s487 + $0x158] sm:$0xff]
        %v518 = vld [vmem:[%s487 + $0x168] sm:$0xff]
        %v519 = vld [vmem:[%s487 + $0x170] sm:$0xff]
        %v520 = vld [vmem:[%s183 + $0x3] sm:$0x1]
        %v521 = vlaneseq
        %v522 = vshrl.u32 %v521, 7
        %v523 = vsub.s32 0, %v522
        %v524 = vrot.slane %v520, %v523
        %v525 = vmul.f32 %v488, %v524
        %v526 = vmul.f32 %v489, %v524
        %v527 = vmul.f32 %v490, %v524
        %v528 = vmul.f32 %v491, %v524
        %v529 = vmul.f32 %v492, %v524
        %v530 = vmul.f32 %v493, %v524
        %v531 = vmul.f32 %v494, %v524
        %v532 = vmul.f32 %v495, %v524
        %v533 = vmul.f32 %v496, %v524
        %v534 = vmul.f32 %v497, %v524
        %v535 = vmul.f32 %v498, %v524
        %v536 = vmul.f32 %v499, %v524
        %v537 = vmul.f32 %v500, %v524
        %v538 = vmul.f32 %v501, %v524
        %v539 = vmul.f32 %v502, %v524
        %v540 = vmul.f32 %v503, %v524
        %v541 = vmul.f32 %v504, %v524
        %v542 = vmul.f32 %v505, %v524
        %v543 = vmul.f32 %v506, %v524
        %v544 = vmul.f32 %v507, %v524
        %v545 = vmul.f32 %v508, %v524
        %v546 = vmul.f32 %v509, %v524
        %v547 = vmul.f32 %v510, %v524
        %v548 = vmul.f32 %v511, %v524
        %v549 = vmul.f32 %v512, %v524
        %v550 = vmul.f32 %v513, %v524
        %v551 = vmul.f32 %v514, %v524
        %v552 = vmul.f32 %v515, %v524
        %v553 = vmul.f32 %v516, %v524
        %v554 = vmul.f32 %v517, %v524
        %v555 = vmul.f32 %v518, %v524
        %v556 = vmul.f32 %v519, %v524
        %v557 = vadd.f32 %v455, %v525
        %v558 = vadd.f32 %v456, %v526
        %v559 = vadd.f32 %v457, %v527
        %v560 = vadd.f32 %v458, %v528
        %v561 = vadd.f32 %v459, %v529
        %v562 = vadd.f32 %v460, %v530
        %v563 = vadd.f32 %v461, %v531
        %v564 = vadd.f32 %v462, %v532
        %v565 = vadd.f32 %v463, %v533
        %v566 = vadd.f32 %v464, %v534
        %v567 = vadd.f32 %v465, %v535
        %v568 = vadd.f32 %v466, %v536
        %v569 = vadd.f32 %v467, %v537
        %v570 = vadd.f32 %v468, %v538
        %v571 = vadd.f32 %v469, %v539
        %v572 = vadd.f32 %v470, %v540
        %v573 = vadd.f32 %v471, %v541
        %v574 = vadd.f32 %v472, %v542
        %v575 = vadd.f32 %v473, %v543
        %v576 = vadd.f32 %v474, %v544
        %v577 = vadd.f32 %v475, %v545
        %v578 = vadd.f32 %v476, %v546
        %v579 = vadd.f32 %v477, %v547
        %v580 = vadd.f32 %v478, %v548
        %v581 = vadd.f32 %v479, %v549
        %v582 = vadd.f32 %v480, %v550
        %v583 = vadd.f32 %v481, %v551
        %v584 = vadd.f32 %v482, %v552
        %v585 = vadd.f32 %v483, %v553
        %v586 = vadd.f32 %v484, %v554
        %v587 = vadd.f32 %v485, %v555
        %v588 = vadd.f32 %v486, %v556
        %v589 = vld [vmem:[%s487 + $0x1] sm:$0xff]
        %v590 = vld [vmem:[%s487 + $0x9] sm:$0xff]
        %v591 = vld [vmem:[%s487 + $0x19] sm:$0xff]
        %v592 = vld [vmem:[%s487 + $0x21] sm:$0xff]
        %v593 = vld [vmem:[%s487 + $0x31] sm:$0xff]
        %v594 = vld [vmem:[%s487 + $0x39] sm:$0xff]
        %v595 = vld [vmem:[%s487 + $0x49] sm:$0xff]
        %v596 = vld [vmem:[%s487 + $0x51] sm:$0xff]
        %v597 = vld [vmem:[%s487 + $0x61] sm:$0xff]
        %v598 = vld [vmem:[%s487 + $0x69] sm:$0xff]
        %v599 = vld [vmem:[%s487 + $0x79] sm:$0xff]
        %v600 = vld [vmem:[%s487 + $0x81] sm:$0xff]
        %v601 = vld [vmem:[%s487 + $0x91] sm:$0xff]
        %v602 = vld [vmem:[%s487 + $0x99] sm:$0xff]
        %v603 = vld [vmem:[%s487 + $0xa9] sm:$0xff]
        %v604 = vld [vmem:[%s487 + $0xb1] sm:$0xff]
        %v605 = vld [vmem:[%s487 + $0xc1] sm:$0xff]
        %v606 = vld [vmem:[%s487 + $0xc9] sm:$0xff]
        %v607 = vld [vmem:[%s487 + $0xd9] sm:$0xff]
        %v608 = vld [vmem:[%s487 + $0xe1] sm:$0xff]
        %v609 = vld [vmem:[%s487 + $0xf1] sm:$0xff]
        %v610 = vld [vmem:[%s487 + $0xf9] sm:$0xff]
        %v611 = vld [vmem:[%s487 + $0x109] sm:$0xff]
        %v612 = vld [vmem:[%s487 + $0x111] sm:$0xff]
        %v613 = vld [vmem:[%s487 + $0x121] sm:$0xff]
        %v614 = vld [vmem:[%s487 + $0x129] sm:$0xff]
        %v615 = vld [vmem:[%s487 + $0x139] sm:$0xff]
        %v616 = vld [vmem:[%s487 + $0x141] sm:$0xff]
        %v617 = vld [vmem:[%s487 + $0x151] sm:$0xff]
        %v618 = vld [vmem:[%s487 + $0x159] sm:$0xff]
        %v619 = vld [vmem:[%s487 + $0x169] sm:$0xff]
        %v620 = vld [vmem:[%s487 + $0x171] sm:$0xff]
        %v621 = vld [vmem:[%s183 + $0x4] sm:$0x1]
        %v622 = vlaneseq
        %v623 = vshrl.u32 %v622, 7
        %v624 = vsub.s32 0, %v623
        %v625 = vrot.slane %v621, %v624
        %v626 = vmul.f32 %v589, %v625
        %v627 = vmul.f32 %v590, %v625
        %v628 = vmul.f32 %v591, %v625
        %v629 = vmul.f32 %v592, %v625
        %v630 = vmul.f32 %v593, %v625
        %v631 = vmul.f32 %v594, %v625
        %v632 = vmul.f32 %v595, %v625
        %v633 = vmul.f32 %v596, %v625
        %v634 = vmul.f32 %v597, %v625
        %v635 = vmul.f32 %v598, %v625
        %v636 = vmul.f32 %v599, %v625
        %v637 = vmul.f32 %v600, %v625
        %v638 = vmul.f32 %v601, %v625
        %v639 = vmul.f32 %v602, %v625
        %v640 = vmul.f32 %v603, %v625
        %v641 = vmul.f32 %v604, %v625
        %v642 = vmul.f32 %v605, %v625
        %v643 = vmul.f32 %v606, %v625
        %v644 = vmul.f32 %v607, %v625
        %v645 = vmul.f32 %v608, %v625
        %v646 = vmul.f32 %v609, %v625
        %v647 = vmul.f32 %v610, %v625
        %v648 = vmul.f32 %v611, %v625
        %v649 = vmul.f32 %v612, %v625
        %v650 = vmul.f32 %v613, %v625
        %v651 = vmul.f32 %v614, %v625
        %v652 = vmul.f32 %v615, %v625
        %v653 = vmul.f32 %v616, %v625
        %v654 = vmul.f32 %v617, %v625
        %v655 = vmul.f32 %v618, %v625
        %v656 = vmul.f32 %v619, %v625
        %v657 = vmul.f32 %v620, %v625
        %v658 = vadd.f32 %v557, %v626
        %v659 = vadd.f32 %v558, %v627
        %v660 = vadd.f32 %v559, %v628
        %v661 = vadd.f32 %v560, %v629
        %v662 = vadd.f32 %v561, %v630
        %v663 = vadd.f32 %v562, %v631
        %v664 = vadd.f32 %v563, %v632
        %v665 = vadd.f32 %v564, %v633
        %v666 = vadd.f32 %v565, %v634
        %v667 = vadd.f32 %v566, %v635
        %v668 = vadd.f32 %v567, %v636
        %v669 = vadd.f32 %v568, %v637
        %v670 = vadd.f32 %v569, %v638
        %v671 = vadd.f32 %v570, %v639
        %v672 = vadd.f32 %v571, %v640
        %v673 = vadd.f32 %v572, %v641
        %v674 = vadd.f32 %v573, %v642
        %v675 = vadd.f32 %v574, %v643
        %v676 = vadd.f32 %v575, %v644
        %v677 = vadd.f32 %v576, %v645
        %v678 = vadd.f32 %v577, %v646
        %v679 = vadd.f32 %v578, %v647
        %v680 = vadd.f32 %v579, %v648
        %v681 = vadd.f32 %v580, %v649
        %v682 = vadd.f32 %v581, %v650
        %v683 = vadd.f32 %v582, %v651
        %v684 = vadd.f32 %v583, %v652
        %v685 = vadd.f32 %v584, %v653
        %v686 = vadd.f32 %v585, %v654
        %v687 = vadd.f32 %v586, %v655
        %v688 = vadd.f32 %v587, %v656
        %v689 = vadd.f32 %v588, %v657
        %v690 = vld [vmem:[%s487 + $0x2] sm:$0xff]
        %v691 = vld [vmem:[%s487 + $0xa] sm:$0xff]
        %v692 = vld [vmem:[%s487 + $0x1a] sm:$0xff]
        %v693 = vld [vmem:[%s487 + $0x22] sm:$0xff]
        %v694 = vld [vmem:[%s487 + $0x32] sm:$0xff]
        %v695 = vld [vmem:[%s487 + $0x3a] sm:$0xff]
        %v696 = vld [vmem:[%s487 + $0x4a] sm:$0xff]
        %v697 = vld [vmem:[%s487 + $0x52] sm:$0xff]
        %v698 = vld [vmem:[%s487 + $0x62] sm:$0xff]
        %v699 = vld [vmem:[%s487 + $0x6a] sm:$0xff]
        %v700 = vld [vmem:[%s487 + $0x7a] sm:$0xff]
        %v701 = vld [vmem:[%s487 + $0x82] sm:$0xff]
        %v702 = vld [vmem:[%s487 + $0x92] sm:$0xff]
        %v703 = vld [vmem:[%s487 + $0x9a] sm:$0xff]
        %v704 = vld [vmem:[%s487 + $0xaa] sm:$0xff]
        %v705 = vld [vmem:[%s487 + $0xb2] sm:$0xff]
        %v706 = vld [vmem:[%s487 + $0xc2] sm:$0xff]
        %v707 = vld [vmem:[%s487 + $0xca] sm:$0xff]
        %v708 = vld [vmem:[%s487 + $0xda] sm:$0xff]
        %v709 = vld [vmem:[%s487 + $0xe2] sm:$0xff]
        %v710 = vld [vmem:[%s487 + $0xf2] sm:$0xff]
        %v711 = vld [vmem:[%s487 + $0xfa] sm:$0xff]
        %v712 = vld [vmem:[%s487 + $0x10a] sm:$0xff]
        %v713 = vld [vmem:[%s487 + $0x112] sm:$0xff]
        %v714 = vld [vmem:[%s487 + $0x122] sm:$0xff]
        %v715 = vld [vmem:[%s487 + $0x12a] sm:$0xff]
        %v716 = vld [vmem:[%s487 + $0x13a] sm:$0xff]
        %v717 = vld [vmem:[%s487 + $0x142] sm:$0xff]
        %v718 = vld [vmem:[%s487 + $0x152] sm:$0xff]
        %v719 = vld [vmem:[%s487 + $0x15a] sm:$0xff]
        %v720 = vld [vmem:[%s487 + $0x16a] sm:$0xff]
        %v721 = vld [vmem:[%s487 + $0x172] sm:$0xff]
        %v722 = vld [vmem:[%s183 + $0x5] sm:$0x1]
        %v723 = vlaneseq
        %v724 = vshrl.u32 %v723, 7
        %v725 = vsub.s32 0, %v724
        %v726 = vrot.slane %v722, %v725
        %v727 = vmul.f32 %v690, %v726
        %v728 = vmul.f32 %v691, %v726
        %v729 = vmul.f32 %v692, %v726
        %v730 = vmul.f32 %v693, %v726
        %v731 = vmul.f32 %v694, %v726
        %v732 = vmul.f32 %v695, %v726
        %v733 = vmul.f32 %v696, %v726
        %v734 = vmul.f32 %v697, %v726
        %v735 = vmul.f32 %v698, %v726
        %v736 = vmul.f32 %v699, %v726
        %v737 = vmul.f32 %v700, %v726
        %v738 = vmul.f32 %v701, %v726
        %v739 = vmul.f32 %v702, %v726
        %v740 = vmul.f32 %v703, %v726
        %v741 = vmul.f32 %v704, %v726
        %v742 = vmul.f32 %v705, %v726
        %v743 = vmul.f32 %v706, %v726
        %v744 = vmul.f32 %v707, %v726
        %v745 = vmul.f32 %v708, %v726
        %v746 = vmul.f32 %v709, %v726
        %v747 = vmul.f32 %v710, %v726
        %v748 = vmul.f32 %v711, %v726
        %v749 = vmul.f32 %v712, %v726
        %v750 = vmul.f32 %v713, %v726
        %v751 = vmul.f32 %v714, %v726
        %v752 = vmul.f32 %v715, %v726
        %v753 = vmul.f32 %v716, %v726
        %v754 = vmul.f32 %v717, %v726
        %v755 = vmul.f32 %v718, %v726
        %v756 = vmul.f32 %v719, %v726
        %v757 = vmul.f32 %v720, %v726
        %v758 = vmul.f32 %v721, %v726
        %v759 = vadd.f32 %v658, %v727
        %v760 = vadd.f32 %v659, %v728
        %v761 = vadd.f32 %v660, %v729
        %v762 = vadd.f32 %v661, %v730
        %v763 = vadd.f32 %v662, %v731
        %v764 = vadd.f32 %v663, %v732
        %v765 = vadd.f32 %v664, %v733
        %v766 = vadd.f32 %v665, %v734
        %v767 = vadd.f32 %v666, %v735
        %v768 = vadd.f32 %v667, %v736
        %v769 = vadd.f32 %v668, %v737
        %v770 = vadd.f32 %v669, %v738
        %v771 = vadd.f32 %v670, %v739
        %v772 = vadd.f32 %v671, %v740
        %v773 = vadd.f32 %v672, %v741
        %v774 = vadd.f32 %v673, %v742
        %v775 = vadd.f32 %v674, %v743
        %v776 = vadd.f32 %v675, %v744
        %v777 = vadd.f32 %v676, %v745
        %v778 = vadd.f32 %v677, %v746
        %v779 = vadd.f32 %v678, %v747
        %v780 = vadd.f32 %v679, %v748
        %v781 = vadd.f32 %v680, %v749
        %v782 = vadd.f32 %v681, %v750
        %v783 = vadd.f32 %v682, %v751
        %v784 = vadd.f32 %v683, %v752
        %v785 = vadd.f32 %v684, %v753
        %v786 = vadd.f32 %v685, %v754
        %v787 = vadd.f32 %v686, %v755
        %v788 = vadd.f32 %v687, %v756
        %v789 = vadd.f32 %v688, %v757
        %v790 = vadd.f32 %v689, %v758
        %s791 = scalar_lea.vmem %s179, 48
        %v792 = vld [vmem:[%s791] sm:$0xff]
        %v793 = vld [vmem:[%s791 + $0x8] sm:$0xff]
        %v794 = vld [vmem:[%s791 + $0x18] sm:$0xff]
        %v795 = vld [vmem:[%s791 + $0x20] sm:$0xff]
        %v796 = vld [vmem:[%s791 + $0x30] sm:$0xff]
        %v797 = vld [vmem:[%s791 + $0x38] sm:$0xff]
        %v798 = vld [vmem:[%s791 + $0x48] sm:$0xff]
        %v799 = vld [vmem:[%s791 + $0x50] sm:$0xff]
        %v800 = vld [vmem:[%s791 + $0x60] sm:$0xff]
        %v801 = vld [vmem:[%s791 + $0x68] sm:$0xff]
        %v802 = vld [vmem:[%s791 + $0x78] sm:$0xff]
        %v803 = vld [vmem:[%s791 + $0x80] sm:$0xff]
        %v804 = vld [vmem:[%s791 + $0x90] sm:$0xff]
        %v805 = vld [vmem:[%s791 + $0x98] sm:$0xff]
        %v806 = vld [vmem:[%s791 + $0xa8] sm:$0xff]
        %v807 = vld [vmem:[%s791 + $0xb0] sm:$0xff]
        %v808 = vld [vmem:[%s791 + $0xc0] sm:$0xff]
        %v809 = vld [vmem:[%s791 + $0xc8] sm:$0xff]
        %v810 = vld [vmem:[%s791 + $0xd8] sm:$0xff]
        %v811 = vld [vmem:[%s791 + $0xe0] sm:$0xff]
        %v812 = vld [vmem:[%s791 + $0xf0] sm:$0xff]
        %v813 = vld [vmem:[%s791 + $0xf8] sm:$0xff]
        %v814 = vld [vmem:[%s791 + $0x108] sm:$0xff]
        %v815 = vld [vmem:[%s791 + $0x110] sm:$0xff]
        %v816 = vld [vmem:[%s791 + $0x120] sm:$0xff]
        %v817 = vld [vmem:[%s791 + $0x128] sm:$0xff]
        %v818 = vld [vmem:[%s791 + $0x138] sm:$0xff]
        %v819 = vld [vmem:[%s791 + $0x140] sm:$0xff]
        %v820 = vld [vmem:[%s791 + $0x150] sm:$0xff]
        %v821 = vld [vmem:[%s791 + $0x158] sm:$0xff]
        %v822 = vld [vmem:[%s791 + $0x168] sm:$0xff]
        %v823 = vld [vmem:[%s791 + $0x170] sm:$0xff]
        %v824 = vld [vmem:[%s183 + $0x6] sm:$0x1]
        %v825 = vlaneseq
        %v826 = vshrl.u32 %v825, 7
        %v827 = vsub.s32 0, %v826
        %v828 = vrot.slane %v824, %v827
        %v829 = vmul.f32 %v792, %v828
        %v830 = vmul.f32 %v793, %v828
        %v831 = vmul.f32 %v794, %v828
        %v832 = vmul.f32 %v795, %v828
        %v833 = vmul.f32 %v796, %v828
        %v834 = vmul.f32 %v797, %v828
        %v835 = vmul.f32 %v798, %v828
        %v836 = vmul.f32 %v799, %v828
        %v837 = vmul.f32 %v800, %v828
        %v838 = vmul.f32 %v801, %v828
        %v839 = vmul.f32 %v802, %v828
        %v840 = vmul.f32 %v803, %v828
        %v841 = vmul.f32 %v804, %v828
        %v842 = vmul.f32 %v805, %v828
        %v843 = vmul.f32 %v806, %v828
        %v844 = vmul.f32 %v807, %v828
        %v845 = vmul.f32 %v808, %v828
        %v846 = vmul.f32 %v809, %v828
        %v847 = vmul.f32 %v810, %v828
        %v848 = vmul.f32 %v811, %v828
        %v849 = vmul.f32 %v812, %v828
        %v850 = vmul.f32 %v813, %v828
        %v851 = vmul.f32 %v814, %v828
        %v852 = vmul.f32 %v815, %v828
        %v853 = vmul.f32 %v816, %v828
        %v854 = vmul.f32 %v817, %v828
        %v855 = vmul.f32 %v818, %v828
        %v856 = vmul.f32 %v819, %v828
        %v857 = vmul.f32 %v820, %v828
        %v858 = vmul.f32 %v821, %v828
        %v859 = vmul.f32 %v822, %v828
        %v860 = vmul.f32 %v823, %v828
        %v861 = vadd.f32 %v759, %v829
        %v862 = vadd.f32 %v760, %v830
        %v863 = vadd.f32 %v761, %v831
        %v864 = vadd.f32 %v762, %v832
        %v865 = vadd.f32 %v763, %v833
        %v866 = vadd.f32 %v764, %v834
        %v867 = vadd.f32 %v765, %v835
        %v868 = vadd.f32 %v766, %v836
        %v869 = vadd.f32 %v767, %v837
        %v870 = vadd.f32 %v768, %v838
        %v871 = vadd.f32 %v769, %v839
        %v872 = vadd.f32 %v770, %v840
        %v873 = vadd.f32 %v771, %v841
        %v874 = vadd.f32 %v772, %v842
        %v875 = vadd.f32 %v773, %v843
        %v876 = vadd.f32 %v774, %v844
        %v877 = vadd.f32 %v775, %v845
        %v878 = vadd.f32 %v776, %v846
        %v879 = vadd.f32 %v777, %v847
        %v880 = vadd.f32 %v778, %v848
        %v881 = vadd.f32 %v779, %v849
        %v882 = vadd.f32 %v780, %v850
        %v883 = vadd.f32 %v781, %v851
        %v884 = vadd.f32 %v782, %v852
        %v885 = vadd.f32 %v783, %v853
        %v886 = vadd.f32 %v784, %v854
        %v887 = vadd.f32 %v785, %v855
        %v888 = vadd.f32 %v786, %v856
        %v889 = vadd.f32 %v787, %v857
        %v890 = vadd.f32 %v788, %v858
        %v891 = vadd.f32 %v789, %v859
        %v892 = vadd.f32 %v790, %v860
        %v893 = vld [vmem:[%s791 + $0x1] sm:$0xff]
        %v894 = vld [vmem:[%s791 + $0x9] sm:$0xff]
        %v895 = vld [vmem:[%s791 + $0x19] sm:$0xff]
        %v896 = vld [vmem:[%s791 + $0x21] sm:$0xff]
        %v897 = vld [vmem:[%s791 + $0x31] sm:$0xff]
        %v898 = vld [vmem:[%s791 + $0x39] sm:$0xff]
        %v899 = vld [vmem:[%s791 + $0x49] sm:$0xff]
        %v900 = vld [vmem:[%s791 + $0x51] sm:$0xff]
        %v901 = vld [vmem:[%s791 + $0x61] sm:$0xff]
        %v902 = vld [vmem:[%s791 + $0x69] sm:$0xff]
        %v903 = vld [vmem:[%s791 + $0x79] sm:$0xff]
        %v904 = vld [vmem:[%s791 + $0x81] sm:$0xff]
        %v905 = vld [vmem:[%s791 + $0x91] sm:$0xff]
        %v906 = vld [vmem:[%s791 + $0x99] sm:$0xff]
        %v907 = vld [vmem:[%s791 + $0xa9] sm:$0xff]
        %v908 = vld [vmem:[%s791 + $0xb1] sm:$0xff]
        %v909 = vld [vmem:[%s791 + $0xc1] sm:$0xff]
        %v910 = vld [vmem:[%s791 + $0xc9] sm:$0xff]
        %v911 = vld [vmem:[%s791 + $0xd9] sm:$0xff]
        %v912 = vld [vmem:[%s791 + $0xe1] sm:$0xff]
        %v913 = vld [vmem:[%s791 + $0xf1] sm:$0xff]
        %v914 = vld [vmem:[%s791 + $0xf9] sm:$0xff]
        %v915 = vld [vmem:[%s791 + $0x109] sm:$0xff]
        %v916 = vld [vmem:[%s791 + $0x111] sm:$0xff]
        %v917 = vld [vmem:[%s791 + $0x121] sm:$0xff]
        %v918 = vld [vmem:[%s791 + $0x129] sm:$0xff]
        %v919 = vld [vmem:[%s791 + $0x139] sm:$0xff]
        %v920 = vld [vmem:[%s791 + $0x141] sm:$0xff]
        %v921 = vld [vmem:[%s791 + $0x151] sm:$0xff]
        %v922 = vld [vmem:[%s791 + $0x159] sm:$0xff]
        %v923 = vld [vmem:[%s791 + $0x169] sm:$0xff]
        %v924 = vld [vmem:[%s791 + $0x171] sm:$0xff]
        %v925 = vld [vmem:[%s183 + $0x7] sm:$0x1]
        %v926 = vlaneseq
        %v927 = vshrl.u32 %v926, 7
        %v928 = vsub.s32 0, %v927
        %v929 = vrot.slane %v925, %v928
        %v930 = vmul.f32 %v893, %v929
        %v931 = vmul.f32 %v894, %v929
        %v932 = vmul.f32 %v895, %v929
        %v933 = vmul.f32 %v896, %v929
        %v934 = vmul.f32 %v897, %v929
        %v935 = vmul.f32 %v898, %v929
        %v936 = vmul.f32 %v899, %v929
        %v937 = vmul.f32 %v900, %v929
        %v938 = vmul.f32 %v901, %v929
        %v939 = vmul.f32 %v902, %v929
        %v940 = vmul.f32 %v903, %v929
        %v941 = vmul.f32 %v904, %v929
        %v942 = vmul.f32 %v905, %v929
        %v943 = vmul.f32 %v906, %v929
        %v944 = vmul.f32 %v907, %v929
        %v945 = vmul.f32 %v908, %v929
        %v946 = vmul.f32 %v909, %v929
        %v947 = vmul.f32 %v910, %v929
        %v948 = vmul.f32 %v911, %v929
        %v949 = vmul.f32 %v912, %v929
        %v950 = vmul.f32 %v913, %v929
        %v951 = vmul.f32 %v914, %v929
        %v952 = vmul.f32 %v915, %v929
        %v953 = vmul.f32 %v916, %v929
        %v954 = vmul.f32 %v917, %v929
        %v955 = vmul.f32 %v918, %v929
        %v956 = vmul.f32 %v919, %v929
        %v957 = vmul.f32 %v920, %v929
        %v958 = vmul.f32 %v921, %v929
        %v959 = vmul.f32 %v922, %v929
        %v960 = vmul.f32 %v923, %v929
        %v961 = vmul.f32 %v924, %v929
        %v962 = vadd.f32 %v861, %v930
        %v963 = vadd.f32 %v862, %v931
        %v964 = vadd.f32 %v863, %v932
        %v965 = vadd.f32 %v864, %v933
        %v966 = vadd.f32 %v865, %v934
        %v967 = vadd.f32 %v866, %v935
        %v968 = vadd.f32 %v867, %v936
        %v969 = vadd.f32 %v868, %v937
        %v970 = vadd.f32 %v869, %v938
        %v971 = vadd.f32 %v870, %v939
        %v972 = vadd.f32 %v871, %v940
        %v973 = vadd.f32 %v872, %v941
        %v974 = vadd.f32 %v873, %v942
        %v975 = vadd.f32 %v874, %v943
        %v976 = vadd.f32 %v875, %v944
        %v977 = vadd.f32 %v876, %v945
        %v978 = vadd.f32 %v877, %v946
        %v979 = vadd.f32 %v878, %v947
        %v980 = vadd.f32 %v879, %v948
        %v981 = vadd.f32 %v880, %v949
        %v982 = vadd.f32 %v881, %v950
        %v983 = vadd.f32 %v882, %v951
        %v984 = vadd.f32 %v883, %v952
        %v985 = vadd.f32 %v884, %v953
        %v986 = vadd.f32 %v885, %v954
        %v987 = vadd.f32 %v886, %v955
        %v988 = vadd.f32 %v887, %v956
        %v989 = vadd.f32 %v888, %v957
        %v990 = vadd.f32 %v889, %v958
        %v991 = vadd.f32 %v890, %v959
        %v992 = vadd.f32 %v891, %v960
        %v993 = vadd.f32 %v892, %v961
        %v994 = vld [vmem:[%s791 + $0x2] sm:$0xff]
        %v995 = vld [vmem:[%s791 + $0xa] sm:$0xff]
        %v996 = vld [vmem:[%s791 + $0x1a] sm:$0xff]
        %v997 = vld [vmem:[%s791 + $0x22] sm:$0xff]
        %v998 = vld [vmem:[%s791 + $0x32] sm:$0xff]
        %v999 = vld [vmem:[%s791 + $0x3a] sm:$0xff]
        %v1000 = vld [vmem:[%s791 + $0x4a] sm:$0xff]
        %v1001 = vld [vmem:[%s791 + $0x52] sm:$0xff]
        %v1002 = vld [vmem:[%s791 + $0x62] sm:$0xff]
        %v1003 = vld [vmem:[%s791 + $0x6a] sm:$0xff]
        %v1004 = vld [vmem:[%s791 + $0x7a] sm:$0xff]
        %v1005 = vld [vmem:[%s791 + $0x82] sm:$0xff]
        %v1006 = vld [vmem:[%s791 + $0x92] sm:$0xff]
        %v1007 = vld [vmem:[%s791 + $0x9a] sm:$0xff]
        %v1008 = vld [vmem:[%s791 + $0xaa] sm:$0xff]
        %v1009 = vld [vmem:[%s791 + $0xb2] sm:$0xff]
        %v1010 = vld [vmem:[%s791 + $0xc2] sm:$0xff]
        %v1011 = vld [vmem:[%s791 + $0xca] sm:$0xff]
        %v1012 = vld [vmem:[%s791 + $0xda] sm:$0xff]
        %v1013 = vld [vmem:[%s791 + $0xe2] sm:$0xff]
        %v1014 = vld [vmem:[%s791 + $0xf2] sm:$0xff]
        %v1015 = vld [vmem:[%s791 + $0xfa] sm:$0xff]
        %v1016 = vld [vmem:[%s791 + $0x10a] sm:$0xff]
        %v1017 = vld [vmem:[%s791 + $0x112] sm:$0xff]
        %v1018 = vld [vmem:[%s791 + $0x122] sm:$0xff]
        %v1019 = vld [vmem:[%s791 + $0x12a] sm:$0xff]
        %v1020 = vld [vmem:[%s791 + $0x13a] sm:$0xff]
        %v1021 = vld [vmem:[%s791 + $0x142] sm:$0xff]
        %v1022 = vld [vmem:[%s791 + $0x152] sm:$0xff]
        %v1023 = vld [vmem:[%s791 + $0x15a] sm:$0xff]
        %v1024 = vld [vmem:[%s791 + $0x16a] sm:$0xff]
        %v1025 = vld [vmem:[%s791 + $0x172] sm:$0xff]
        %v1026 = vld [vmem:[%s183 + $0x8] sm:$0x1]
        %v1027 = vlaneseq
        %v1028 = vshrl.u32 %v1027, 7
        %v1029 = vsub.s32 0, %v1028
        %v1030 = vrot.slane %v1026, %v1029
        %v1031 = vmul.f32 %v994, %v1030
        %v1032 = vmul.f32 %v995, %v1030
        %v1033 = vmul.f32 %v996, %v1030
        %v1034 = vmul.f32 %v997, %v1030
        %v1035 = vmul.f32 %v998, %v1030
        %v1036 = vmul.f32 %v999, %v1030
        %v1037 = vmul.f32 %v1000, %v1030
        %v1038 = vmul.f32 %v1001, %v1030
        %v1039 = vmul.f32 %v1002, %v1030
        %v1040 = vmul.f32 %v1003, %v1030
        %v1041 = vmul.f32 %v1004, %v1030
        %v1042 = vmul.f32 %v1005, %v1030
        %v1043 = vmul.f32 %v1006, %v1030
        %v1044 = vmul.f32 %v1007, %v1030
        %v1045 = vmul.f32 %v1008, %v1030
        %v1046 = vmul.f32 %v1009, %v1030
        %v1047 = vmul.f32 %v1010, %v1030
        %v1048 = vmul.f32 %v1011, %v1030
        %v1049 = vmul.f32 %v1012, %v1030
        %v1050 = vmul.f32 %v1013, %v1030
        %v1051 = vmul.f32 %v1014, %v1030
        %v1052 = vmul.f32 %v1015, %v1030
        %v1053 = vmul.f32 %v1016, %v1030
        %v1054 = vmul.f32 %v1017, %v1030
        %v1055 = vmul.f32 %v1018, %v1030
        %v1056 = vmul.f32 %v1019, %v1030
        %v1057 = vmul.f32 %v1020, %v1030
        %v1058 = vmul.f32 %v1021, %v1030
        %v1059 = vmul.f32 %v1022, %v1030
        %v1060 = vmul.f32 %v1023, %v1030
        %v1061 = vmul.f32 %v1024, %v1030
        %v1062 = vmul.f32 %v1025, %v1030
        %v1063 = vadd.f32 %v962, %v1031
        %v1064 = vadd.f32 %v963, %v1032
        %v1065 = vadd.f32 %v964, %v1033
        %v1066 = vadd.f32 %v965, %v1034
        %v1067 = vadd.f32 %v966, %v1035
        %v1068 = vadd.f32 %v967, %v1036
        %v1069 = vadd.f32 %v968, %v1037
        %v1070 = vadd.f32 %v969, %v1038
        %v1071 = vadd.f32 %v970, %v1039
        %v1072 = vadd.f32 %v971, %v1040
        %v1073 = vadd.f32 %v972, %v1041
        %v1074 = vadd.f32 %v973, %v1042
        %v1075 = vadd.f32 %v974, %v1043
        %v1076 = vadd.f32 %v975, %v1044
        %v1077 = vadd.f32 %v976, %v1045
        %v1078 = vadd.f32 %v977, %v1046
        %v1079 = vadd.f32 %v978, %v1047
        %v1080 = vadd.f32 %v979, %v1048
        %v1081 = vadd.f32 %v980, %v1049
        %v1082 = vadd.f32 %v981, %v1050
        %v1083 = vadd.f32 %v982, %v1051
        %v1084 = vadd.f32 %v983, %v1052
        %v1085 = vadd.f32 %v984, %v1053
        %v1086 = vadd.f32 %v985, %v1054
        %v1087 = vadd.f32 %v986, %v1055
        %v1088 = vadd.f32 %v987, %v1056
        %v1089 = vadd.f32 %v988, %v1057
        %v1090 = vadd.f32 %v989, %v1058
        %v1091 = vadd.f32 %v990, %v1059
        %v1092 = vadd.f32 %v991, %v1060
        %v1093 = vadd.f32 %v992, %v1061
        %v1094 = vadd.f32 %v993, %v1062
        %1095 = vst [vmem:[%s171] sm:$0xff] %v1063
        %1096 = vst [vmem:[%s171 + $0x8] sm:$0xff] %v1064
        %1097 = vst [vmem:[%s171 + $0x10] sm:$0xff] %v1065
        %1098 = vst [vmem:[%s171 + $0x18] sm:$0xff] %v1066
        %1099 = vst [vmem:[%s171 + $0x20] sm:$0xff] %v1067
        %1100 = vst [vmem:[%s171 + $0x28] sm:$0xff] %v1068
        %1101 = vst [vmem:[%s171 + $0x30] sm:$0xff] %v1069
        %1102 = vst [vmem:[%s171 + $0x38] sm:$0xff] %v1070
        %1103 = vst [vmem:[%s171 + $0x40] sm:$0xff] %v1071
        %1104 = vst [vmem:[%s171 + $0x48] sm:$0xff] %v1072
        %1105 = vst [vmem:[%s171 + $0x50] sm:$0xff] %v1073
        %1106 = vst [vmem:[%s171 + $0x58] sm:$0xff] %v1074
        %1107 = vst [vmem:[%s171 + $0x60] sm:$0xff] %v1075
        %1108 = vst [vmem:[%s171 + $0x68] sm:$0xff] %v1076
        %1109 = vst [vmem:[%s171 + $0x70] sm:$0xff] %v1077
        %1110 = vst [vmem:[%s171 + $0x78] sm:$0xff] %v1078
        %1111 = vst [vmem:[%s171 + $0x80] sm:$0xff] %v1079
        %1112 = vst [vmem:[%s171 + $0x88] sm:$0xff] %v1080
        %1113 = vst [vmem:[%s171 + $0x90] sm:$0xff] %v1081
        %1114 = vst [vmem:[%s171 + $0x98] sm:$0xff] %v1082
        %1115 = vst [vmem:[%s171 + $0xa0] sm:$0xff] %v1083
        %1116 = vst [vmem:[%s171 + $0xa8] sm:$0xff] %v1084
        %1117 = vst [vmem:[%s171 + $0xb0] sm:$0xff] %v1085
        %1118 = vst [vmem:[%s171 + $0xb8] sm:$0xff] %v1086
        %1119 = vst [vmem:[%s171 + $0xc0] sm:$0xff] %v1087
        %1120 = vst [vmem:[%s171 + $0xc8] sm:$0xff] %v1088
        %1121 = vst [vmem:[%s171 + $0xd0] sm:$0xff] %v1089
        %1122 = vst [vmem:[%s171 + $0xd8] sm:$0xff] %v1090
        %1123 = vst [vmem:[%s171 + $0xe0] sm:$0xff] %v1091
        %1124 = vst [vmem:[%s171 + $0xe8] sm:$0xff] %v1092
        %1125 = vst [vmem:[%s171 + $0xf0] sm:$0xff] %v1093
        %1126 = vst [vmem:[%s171 + $0xf8] sm:$0xff] %v1094
        %s1127 = sand.u32 %s92, 1
        %s1128 = scalar_lea.sflag [#allocation3], %s1127
        %s1129 = sand.u32 %s92, 1
        %s1130 = smul.addr %s1129, 256
        %s1131 = scalar_lea.vmem [#allocation2], %s1130
        // Predicated region
        $region29: #{tpu_custom_call.1} parent=27 // pred_check
          %p1132 = pneg %p102
        $region30: #{tpu_custom_call.1} parent=27 // pred_check_branch
          %1134 = sbr.rel (%p1132) target = $region32
        $region31: #{tpu_custom_call.1} parent=27 // pred_region
          %s1136 = ssub.s32 4096, 4096
          %1137 = vsyncadd %s1128, %s1136
          %s1138 = smul.addr %s20, 32
          %s1139 = sadd.s32 %s21, %s1138
          %s1140 = smul.addr %s1139, 128
          %s1141 = scalar_lea.hbm %s2, %s1140
          %s1142 = sshll.u32 %s1131, 4
          %s1143 = int_to_ptr.vmem [resolvable:$true] %s1142
          %1148 = dma.vmem_to_hbm [thread:$0]  %s1143, 4096, %s1141, %s1128, 128, 128, 8
        $region32: #{tpu_custom_call.1} parent=27 // pred_fallthru
          _
      $region28: #{tpu_custom_call.1} parent=5 // pred_fallthru
        _
      %p1149 = scmp.le.s32.totalorder 2, %s11
      // Predicated region
      $region33: #{tpu_custom_call.1} parent=5 // pred_check
        %p1150 = pneg %p1149
      $region34: #{tpu_custom_call.1} parent=5 // pred_check_branch
        %1152 = sbr.rel (%p1150) target = $region36
      $region35: #{tpu_custom_call.1} parent=5 // pred_region
        %s1153 = ssub.s32 %s11, 2
        // Predicated region
        $region37: #{tpu_custom_call.1} parent=35 // pred_check
          %p1154 = pneg %p108
        $region38: #{tpu_custom_call.1} parent=35 // pred_check_branch
          %1156 = sbr.rel (%p1154) target = $region40
        $region39: #{tpu_custom_call.1} parent=35 // pred_region
          %s1157 = sand.u32 %s93, 1
          %s1158 = scalar_lea.sflag [#allocation3], %s1157
          %s1159 = sand.u32 %s93, 1
          %s1160 = smul.addr %s1159, 256
          %s1161 = scalar_lea.vmem [#allocation2], %s1160
          %1162 = dma.done %s1158, 4096
        $region40: #{tpu_custom_call.1} parent=35 // pred_fallthru
          _
      $region36: #{tpu_custom_call.1} parent=5 // pred_fallthru
        _
    $region6: #{tpu_custom_call.1} parent=1 // loop_footer
      %s15 = sadd.s32 1, %s11
    $region7: #{tpu_custom_call.1} parent=1 // loop_footer_branch
      %10 = sbr.rel target = $region3
    $region8: #{tpu_custom_call.1} parent=1 // loop_exit
      _
    %1163 = vsyncpa [#allocation3], 1
    %s1164 = scalar_lea.sflag [#allocation3], 1
    %1165 = vsyncpa %s1164, 1

</llo_original>
